<compile_context>
chip_gen: v7x
topology: tpu7x:2x2x1
jax: 0.10.0
libtpu: 0.0.40
codegen_flags: <defaults>
</compile_context>

<pallas_src>
import functools

import jax
import jax.numpy as jnp
from jax import lax
from jax.experimental import pallas as pl
from jax.experimental.pallas import tpu as pltpu


def _round_up(a, b):
    return ((a + b - 1) // b) * b


# --------------------------------------------------------------------------
# Kernel bodies
# --------------------------------------------------------------------------

def _mlp_kernel_fused(x_ref, w1_ref, b1_ref, w2_ref, b2_ref, o_ref):
    # Weights fully resident: x_ref (tm, C), w1_ref (C, H), b1_ref (1, H),
    # w2_ref (H, C), b2_ref (1, C), o_ref (tm, C). Grid = (row tiles,).
    h = jnp.dot(x_ref[...], w1_ref[...], preferred_element_type=jnp.float32)
    h = h + b1_ref[...].astype(jnp.float32)
    # Exact (erf) GELU -- matches torch.nn.GELU() default.
    h = 0.5 * h * (1.0 + lax.erf(h * 0.7071067811865476))
    y = jnp.dot(h.astype(w2_ref.dtype), w2_ref[...],
                preferred_element_type=jnp.float32)
    o_ref[...] = (y + b2_ref[...].astype(jnp.float32)).astype(o_ref.dtype)


def _mlp_kernel_htiled(x_ref, w1_ref, b1_ref, w2_ref, b2_ref, o_ref, acc_ref):
    # H-tiled path: x_ref (tm, C), w1_ref (C, th), b1_ref (1, th),
    # w2_ref (th, C), b2_ref (1, C), o_ref (tm, C), acc_ref (tm, C) f32.
    # Grid = (row tiles, H tiles); H axis is the reduction (last, "arbitrary").
    h_idx = pl.program_id(1)

    @pl.when(h_idx == 0)
    def _init():
        acc_ref[...] = jnp.zeros_like(acc_ref)

    h = jnp.dot(x_ref[...], w1_ref[...], preferred_element_type=jnp.float32)
    h = h + b1_ref[...].astype(jnp.float32)
    h = 0.5 * h * (1.0 + lax.erf(h * 0.7071067811865476))
    acc_ref[...] += jnp.dot(h.astype(w2_ref.dtype), w2_ref[...],
                            preferred_element_type=jnp.float32)

    @pl.when(h_idx == pl.num_programs(1) - 1)
    def _finalize():
        o_ref[...] = (acc_ref[...]
                      + b2_ref[...].astype(jnp.float32)).astype(o_ref.dtype)


# --------------------------------------------------------------------------
# Tiling heuristics
# --------------------------------------------------------------------------

def _pick_row_tile(M, C):
    """Largest row tile (<=512, multiple of 8) keeping the f32 accumulator /
    output tile bounded for very wide embeddings."""
    tm = 512
    while tm > 128 and tm * C * 4 > (8 << 20):
        tm //= 2
    if M < tm:
        tm = _round_up(M, 8)
    return tm


def _pick_hidden_tile(C, H, itemsize,
                      resident_budget=24 << 20, tile_budget=10 << 20):
    """Return H if both weight matrices fit comfortably in VMEM (fused path);
    otherwise the largest 128-multiple divisor of H whose two weight tiles fit
    within tile_budget (they get double-buffered along the H grid axis)."""
    if 2 * C * H * itemsize <= resident_budget or H % 128 != 0:
        return H
    for cand in range(H, 127, -128):
        if H % cand == 0 and 2 * C * cand * itemsize <= tile_budget:
            return cand
    return 128


# --------------------------------------------------------------------------
# Wrapper
# --------------------------------------------------------------------------

@functools.partial(jax.jit, static_argnames=("tm", "th"))
def mlp_forward(x, w1t, b1r, w2t, b2r, *, tm=None, th=None):
    """Fused GPT MLP forward.

    x: (B, T, C).  w1t: (C, 4C) = fc1.weight.T,  b1r: (1, 4C),
    w2t: (4C, C) = fc2.weight.T,  b2r: (1, C).
    Weight transposes are done once in prepare_params (off the hot path).
    """
    B, T, C = x.shape
    H = w1t.shape[1]
    M = B * T

    w_item = jnp.dtype(w1t.dtype).itemsize
    x_item = jnp.dtype(x.dtype).itemsize

    if tm is None:
        tm = _pick_row_tile(M, C)
    if th is None:
        th = _pick_hidden_tile(C, H, w_item)
    assert H % th == 0
    n_h = H // th

    # Pad rows instead of forcing tm down to a divisor of B*T.
    M_pad = _round_up(M, tm)
    x2 = x.reshape(M, C)
    if M_pad != M:
        x2 = jnp.pad(x2, ((0, M_pad - M), (0, 0)))

    inv = pl.Buffered(1)  # grid-invariant operands: single-buffer.

    if n_h == 1:
        # ---------------- Fully-resident weights: 1-D grid over rows --------
        footprint = (
            (C * H + H + H * C + C) * w_item      # w1, b1, w2, b2 (1 buffer)
            + 2 * tm * C * x_item                 # x tile (double buffered)
            + 2 * tm * C * x_item                 # out tile (double buffered)
            + tm * H * 4 + tm * H * w_item        # fc1/GELU intermediate
        )
        vmem_limit = max(32 << 20,
                         min(int(footprint * 1.4) + (4 << 20), 128 << 20))
        grid = (M_pad // tm,)
        out = pl.pallas_call(
            _mlp_kernel_fused,
            out_shape=jax.ShapeDtypeStruct((M_pad, C), x.dtype),
            grid_spec=pltpu.PrefetchScalarGridSpec(
                num_scalar_prefetch=0,
                grid=grid,
                in_specs=[
                    pl.BlockSpec((tm, C), lambda i: (i, 0)),                    # x rows
                    pl.BlockSpec((C, H), lambda i: (0, 0), pipeline_mode=inv),  # W1^T
                    pl.BlockSpec((1, H), lambda i: (0, 0), pipeline_mode=inv),  # b1
                    pl.BlockSpec((H, C), lambda i: (0, 0), pipeline_mode=inv),  # W2^T
                    pl.BlockSpec((1, C), lambda i: (0, 0), pipeline_mode=inv),  # b2
                ],
                out_specs=pl.BlockSpec((tm, C), lambda i: (i, 0)),
            ),
            compiler_params=pltpu.CompilerParams(
                dimension_semantics=("parallel",),
                vmem_limit_bytes=vmem_limit,
            ),
        )(x2, w1t, b1r, w2t, b2r)
    else:
        # ---------------- H-tiled path: rows x hidden-tiles grid -------------
        footprint = (
            2 * (C * th + th + th * C) * w_item   # w1/b1/w2 tiles, 2 buffers
            + C * w_item                          # b2
            + 2 * tm * C * x_item                 # x tile (double buffered)
            + 2 * tm * C * x_item                 # out tile (double buffered)
            + tm * C * 4                          # f32 accumulator scratch
            + tm * th * 4 + tm * th * w_item      # fc1/GELU intermediate
        )
        vmem_limit = max(32 << 20,
                         min(int(footprint * 1.4) + (4 << 20), 128 << 20))
        grid = (M_pad // tm, n_h)
        out = pl.pallas_call(
            _mlp_kernel_htiled,
            out_shape=jax.ShapeDtypeStruct((M_pad, C), x.dtype),
            grid_spec=pltpu.PrefetchScalarGridSpec(
                num_scalar_prefetch=0,
                grid=grid,
                in_specs=[
                    pl.BlockSpec((tm, C), lambda i, h: (i, 0)),                     # x rows
                    pl.BlockSpec((C, th), lambda i, h: (0, h)),                     # W1^T tile
                    pl.BlockSpec((1, th), lambda i, h: (0, h)),                     # b1 tile
                    pl.BlockSpec((th, C), lambda i, h: (h, 0)),                     # W2^T tile
                    pl.BlockSpec((1, C), lambda i, h: (0, 0), pipeline_mode=inv),   # b2
                ],
                out_specs=pl.BlockSpec((tm, C), lambda i, h: (i, 0)),
                scratch_shapes=[pltpu.VMEM((tm, C), jnp.float32)],
            ),
            compiler_params=pltpu.CompilerParams(
                dimension_semantics=("parallel", "arbitrary"),
                vmem_limit_bytes=vmem_limit,
            ),
        )(x2, w1t, b1r, w2t, b2r)

    return out[:M].reshape(B, T, C)


# --------------------------------------------------------------------------
# Params / reference
# --------------------------------------------------------------------------

def prepare_params(w1, b1, w2, b2):
    """One-time layout prep (weight transposes / bias reshapes), hoisted out of
    the per-call jit path so no per-forward HBM transpose traffic is paid."""
    return w1.T, b1.reshape(1, -1), w2.T, b2.reshape(1, -1)


def init_params(key, n_embd, bias=True):
    """Deterministic init mimicking the PyTorch module's __init__."""
    hidden = 4 * n_embd
    k1, k2, k3, k4 = jax.random.split(key, 4)

    # fc1: torch.nn.Linear default init: U(-1/sqrt(fan_in), 1/sqrt(fan_in))
    bound1 = 1.0 / (n_embd ** 0.5)
    w1 = jax.random.uniform(k1, (hidden, n_embd), jnp.float32, -bound1, bound1)
    b1 = (jax.random.uniform(k2, (hidden,), jnp.float32, -bound1, bound1)
          if bias else jnp.zeros((hidden,), jnp.float32))

    # fc2: xavier_uniform_ on weight, default init on bias
    bound2 = (6.0 / (hidden + n_embd)) ** 0.5
    w2 = jax.random.uniform(k3, (n_embd, hidden), jnp.float32, -bound2, bound2)
    bound2b = 1.0 / (hidden ** 0.5)
    b2 = (jax.random.uniform(k4, (n_embd,), jnp.float32, -bound2b, bound2b)
          if bias else jnp.zeros((n_embd,), jnp.float32))
    return w1, b1, w2, b2


def _reference(x, w1, b1, w2, b2):
    h = x @ w1.T + b1
    h = 0.5 * h * (1.0 + lax.erf(h * 0.7071067811865476))
    return h @ w2.T + b2


if __name__ == "__main__":
    key = jax.random.PRNGKey(0)

    # --- case 1: small config (n_embd=32 -> hidden=128), fused path ---------
    B, T, n_embd = 2, 8, 32
    kx, kp, kx2, kp2 = jax.random.split(key, 4)

    x = jax.random.normal(kx, (B, T, n_embd), jnp.float32)
    w1, b1, w2, b2 = init_params(kp, n_embd, bias=True)
    w1t, b1r, w2t, b2r = prepare_params(w1, b1, w2, b2)

    y = jax.block_until_ready(mlp_forward(x, w1t, b1r, w2t, b2r))
    y_ref = _reference(x, w1, b1, w2, b2)
    assert y.shape == (B, T, n_embd)
    assert jnp.allclose(y, y_ref, atol=1e-4, rtol=1e-4)

    # --- case 2: force hidden-dim tiling (exercises accumulator path) -------
    n_embd2 = 256
    x2 = jax.random.normal(kx2, (B, T, n_embd2), jnp.float32)
    w1b, b1b, w2b, b2b = init_params(kp2, n_embd2, bias=True)
    w1tb, b1rb, w2tb, b2rb = prepare_params(w1b, b1b, w2b, b2b)

    y2 = jax.block_until_ready(mlp_forward(x2, w1tb, b1rb, w2tb, b2rb, th=128))
    y2_ref = _reference(x2, w1b, b1b, w2b, b2b)
    assert y2.shape == (B, T, n_embd2)
    assert jnp.allclose(y2, y2_ref, atol=1e-4, rtol=1e-4)

    print("KERNEL_OK")
</pallas_src>

<mosaic_0001>
module attributes {stable_mosaic.version = 11 : i64} {
  func.func @_mlp_kernel_fused(%arg0: i32, %arg1: memref<16x32xf32, #tpu.memory_space<vmem>>, %arg2: memref<32x128xf32, #tpu.memory_space<vmem>>, %arg3: memref<1x128xf32, #tpu.memory_space<vmem>>, %arg4: memref<128x32xf32, #tpu.memory_space<vmem>>, %arg5: memref<1x32xf32, #tpu.memory_space<vmem>>, %arg6: memref<16x32xf32, #tpu.memory_space<vmem>>) attributes {dimension_semantics = [#tpu.dimension_semantics<parallel>], iteration_bounds = array<i64: 1>, scalar_prefetch = 0 : i64, scratch_operands = 0 : i64, tpu.core_type = #tpu.core_type<tc>, window_params = [{transform_indices = @transform_0, window_bounds = array<i64: 16, 32>}, {pipeline_mode = #tpu.pipeline_mode<synchronous>, transform_indices = @transform_1, window_bounds = array<i64: 32, 128>}, {pipeline_mode = #tpu.pipeline_mode<synchronous>, transform_indices = @transform_2, window_bounds = array<i64: 1, 128>}, {pipeline_mode = #tpu.pipeline_mode<synchronous>, transform_indices = @transform_3, window_bounds = array<i64: 128, 32>}, {pipeline_mode = #tpu.pipeline_mode<synchronous>, transform_indices = @transform_4, window_bounds = array<i64: 1, 32>}, {transform_indices = @transform_5, window_bounds = array<i64: 16, 32>}]} {
    %c0 = arith.constant 0 : index
    %c0_0 = arith.constant 0 : index
    %0 = vector.load %arg1[%c0, %c0_0] : memref<16x32xf32, #tpu.memory_space<vmem>>, vector<16x32xf32>
    %c0_1 = arith.constant 0 : index
    %c0_2 = arith.constant 0 : index
    %1 = vector.load %arg2[%c0_1, %c0_2] : memref<32x128xf32, #tpu.memory_space<vmem>>, vector<32x128xf32>
    %cst = arith.constant dense<0.000000e+00> : vector<16x128xf32>
    %2 = tpu.matmul %0, %1, %cst {dimension_numbers = #tpu.dot_dimension_numbers<[1], [0], [0], [1], [0, 0, 1, 1], [], []>} : vector<16x32xf32>, vector<32x128xf32>, vector<16x128xf32> -> vector<16x128xf32>
    %c0_3 = arith.constant 0 : index
    %c0_4 = arith.constant 0 : index
    %3 = vector.load %arg3[%c0_3, %c0_4] : memref<1x128xf32, #tpu.memory_space<vmem>>, vector<1x128xf32>
    %4 = vector.broadcast %3 : vector<1x128xf32> to vector<16x128xf32>
    %5 = arith.addf %2, %4 : vector<16x128xf32>
    %cst_5 = arith.constant 5.000000e-01 : f32
    %6 = vector.broadcast %cst_5 : f32 to vector<16x128xf32>
    %7 = arith.mulf %6, %5 : vector<16x128xf32>
    %cst_6 = arith.constant 0.707106769 : f32
    %8 = vector.broadcast %cst_6 : f32 to vector<16x128xf32>
    %9 = arith.mulf %5, %8 : vector<16x128xf32>
    %10 = math.erf %9 : vector<16x128xf32>
    %cst_7 = arith.constant 1.000000e+00 : f32
    %11 = vector.broadcast %cst_7 : f32 to vector<16x128xf32>
    %12 = arith.addf %11, %10 : vector<16x128xf32>
    %13 = arith.mulf %7, %12 : vector<16x128xf32>
    %c0_8 = arith.constant 0 : index
    %c0_9 = arith.constant 0 : index
    %14 = vector.load %arg4[%c0_8, %c0_9] : memref<128x32xf32, #tpu.memory_space<vmem>>, vector<128x32xf32>
    %cst_10 = arith.constant dense<0.000000e+00> : vector<16x32xf32>
    %15 = tpu.matmul %13, %14, %cst_10 {dimension_numbers = #tpu.dot_dimension_numbers<[1], [0], [0], [1], [0, 0, 1, 1], [], []>} : vector<16x128xf32>, vector<128x32xf32>, vector<16x32xf32> -> vector<16x32xf32>
    %c0_11 = arith.constant 0 : index
    %c0_12 = arith.constant 0 : index
    %16 = vector.load %arg5[%c0_11, %c0_12] : memref<1x32xf32, #tpu.memory_space<vmem>>, vector<1x32xf32>
    %17 = vector.broadcast %16 : vector<1x32xf32> to vector<16x32xf32>
    %18 = arith.addf %15, %17 : vector<16x32xf32>
    %c0_13 = arith.constant 0 : index
    %c0_14 = arith.constant 0 : index
    %19 = vector.load %arg6[%c0_13, %c0_14] : memref<16x32xf32, #tpu.memory_space<vmem>>, vector<16x32xf32>
    tpu.vector_store %arg6[%c0_13, %c0_14], %18 {strides = array<i32>} : memref<16x32xf32, #tpu.memory_space<vmem>>, vector<16x32xf32>,
    return
  }
  func.func @transform_0(%arg0: i32) -> (i32, i32) {
    %c0_i32 = arith.constant 0 : i32
    %c0_i32_0 = arith.constant 0 : i32
    return %arg0, %c0_i32 : i32, i32
  }
  func.func @transform_1(%arg0: i32) -> (i32, i32) {
    %c0_i32 = arith.constant 0 : i32
    %c0_i32_0 = arith.constant 0 : i32
    %c0_i32_1 = arith.constant 0 : i32
    return %c0_i32, %c0_i32_0 : i32, i32
  }
  func.func @transform_2(%arg0: i32) -> (i32, i32) {
    %c0_i32 = arith.constant 0 : i32
    %c0_i32_0 = arith.constant 0 : i32
    %c0_i32_1 = arith.constant 0 : i32
    return %c0_i32, %c0_i32_0 : i32, i32
  }
  func.func @transform_3(%arg0: i32) -> (i32, i32) {
    %c0_i32 = arith.constant 0 : i32
    %c0_i32_0 = arith.constant 0 : i32
    %c0_i32_1 = arith.constant 0 : i32
    return %c0_i32, %c0_i32_0 : i32, i32
  }
  func.func @transform_4(%arg0: i32) -> (i32, i32) {
    %c0_i32 = arith.constant 0 : i32
    %c0_i32_0 = arith.constant 0 : i32
    %c0_i32_1 = arith.constant 0 : i32
    return %c0_i32, %c0_i32_0 : i32, i32
  }
  func.func @transform_5(%arg0: i32) -> (i32, i32) {
    %c0_i32 = arith.constant 0 : i32
    %c0_i32_0 = arith.constant 0 : i32
    return %arg0, %c0_i32 : i32, i32
  }
}

</mosaic_0001>

<llo_original>
// kernel: mlp_forward.1
$region0: #{mlp_forward.1}
  #allocation0 [shape = 'u32[]', space=smem, size = 0x4, offset = 0x4, fixed_abs, tag = 'smem constant byte address 0x4 - core index']
  #allocation1 [shape = 'u32[144,128]{1,0:T(1,128)}', space=vmem, size = 0x12000, scoped, tag = 'internal scratch']
  %s0 = inlined_call_operand.vmem [shape: f32[16,32], index: 0, kind: input, shape index: {}]
  %s1 = inlined_call_operand.vmem [shape: f32[32,128], index: 1, kind: input, shape index: {}]
  %s2 = inlined_call_operand.vmem [shape: f32[1,128], index: 2, kind: input, shape index: {}]
  %s3 = inlined_call_operand.vmem [shape: f32[128,32], index: 3, kind: input, shape index: {}]
  %s4 = inlined_call_operand.vmem [shape: f32[1,32], index: 4, kind: input, shape index: {}]
  %s5 = inlined_call_operand.hbm [shape: f32[16,32], index: 5, kind: output, shape index: {}]
  %s6 = sld [smem:[#allocation0]]
  $region30: #{mlp_forward.1} parent=0
    _
  %s8 = ssub.s32 1, %s6
  %s9 = scalar_select 0, %s8, %s6
  $region1: #{mlp_forward.1} parent=0
    #allocation2 [shape = 'u8[8192]{0}', space=vmem, size = 0x2000, scoped, tag = 'output window, operand 0, single buffered']
    #allocation3 [shape = 's32[1]{0}', space=sflag, size = 0x4, scoped, tag = 'scoped memory for mlp_forward.1']
    %10 = vsyncpa [#allocation3], 0
    // Predicated region
    $region2: #{mlp_forward.1} parent=1 // pred_check
      _
    $region3: #{mlp_forward.1} parent=1 // pred_check_branch
      %12 = sbr.rel (0) target = $region5
    $region4: #{mlp_forward.1} parent=1 // pred_region
      _
    $region5: #{mlp_forward.1} parent=1 // pred_fallthru
      _
    // Predicated region
    $region6: #{mlp_forward.1} parent=1 // pred_check
      _
    $region7: #{mlp_forward.1} parent=1 // pred_check_branch
      %14 = sbr.rel (0) target = $region9
    $region8: #{mlp_forward.1} parent=1 // pred_region
      _
    $region9: #{mlp_forward.1} parent=1 // pred_fallthru
      _
    // Predicated region
    $region10: #{mlp_forward.1} parent=1 // pred_check
      _
    $region11: #{mlp_forward.1} parent=1 // pred_check_branch
      %16 = sbr.rel (0) target = $region13
    $region12: #{mlp_forward.1} parent=1 // pred_region
      _
    $region13: #{mlp_forward.1} parent=1 // pred_fallthru
      _
    // Predicated region
    $region14: #{mlp_forward.1} parent=1 // pred_check
      _
    $region15: #{mlp_forward.1} parent=1 // pred_check_branch
      %18 = sbr.rel (0) target = $region17
    $region16: #{mlp_forward.1} parent=1 // pred_region
      _
    $region17: #{mlp_forward.1} parent=1 // pred_fallthru
      _
    // Predicated region
    $region18: #{mlp_forward.1} parent=1 // pred_check
      _
    $region19: #{mlp_forward.1} parent=1 // pred_check_branch
      %20 = sbr.rel (0) target = $region21
    $region20: #{mlp_forward.1} parent=1 // pred_region
      _
    $region21: #{mlp_forward.1} parent=1 // pred_fallthru
      _
    %v21 = vld [vmem:[%s0] sm:$0xff]
    %v22 = vld [vmem:[%s0 + $0x8] sm:$0xff]
    %v23 = vld [vmem:[%s1] sm:$0xff]
    %v24 = vld [vmem:[%s1 + $0x8] sm:$0xff]
    %v25 = vld [vmem:[%s1 + $0x10] sm:$0xff]
    %v26 = vld [vmem:[%s1 + $0x18] sm:$0xff]
    %v27 = vld [vmem:[%s2] sm:$0x1]
    %v29 = vlaneseq
    %v30 = vshrl.u32 %v29, 7
    %v31 = vsub.s32 0, %v30
    %v32 = vrot.slane %v27, %v31
    %vm34 = vcmask 261120
    %v36 = vsel %vm34, %v21, 0
    %v39 = vsel %vm34, %v22, 0
    %41 = vmatprep.subr.mxu0 0.0
    %42 = vmatpush1.msra.mxu0 %v23
    %43 = vmatprep.subr.mxu0 0.0
    %44 = vmatpush1.msra.mxu0 %v24
    %45 = vmatprep.subr.mxu0 0.0
    %46 = vmatpush1.msra.mxu0 %v25
    %47 = vmatprep.subr.mxu0 0.0
    %48 = vmatpush1.msra.mxu0 %v26
    %49 = vmatprep.subr.mxu0 0.0
    %50 = vmatpush1.msra.mxu0 0.0
    %51 = vmatprep.subr.mxu0 0.0
    %52 = vmatpush1.msra.mxu0 0.0
    %53 = vmatprep.subr.mxu0 0.0
    %54 = vmatpush1.msra.mxu0 0.0
    %55 = vmatprep.subr.mxu0 0.0
    %56 = vmatpush1.msra.mxu0 0.0
    %57 = vmatprep.subr.mxu0 0.0
    %58 = vmatpush1.msra.mxu0 0.0
    %59 = vmatprep.subr.mxu0 0.0
    %60 = vmatpush1.msra.mxu0 0.0
    %61 = vmatprep.subr.mxu0 0.0
    %62 = vmatpush1.msra.mxu0 0.0
    %63 = vmatprep.subr.mxu0 0.0
    %64 = vmatpush1.msra.mxu0 0.0
    %65 = vmatprep.subr.mxu0 0.0
    %66 = vmatpush1.msra.mxu0 0.0
    %67 = vmatprep.subr.mxu0 0.0
    %68 = vmatpush1.msra.mxu0 0.0
    %69 = vmatprep.subr.mxu0 0.0
    %70 = vmatpush1.msra.mxu0 0.0
    %71 = vmatprep.subr.mxu0 0.0
    %72 = vmatpush1.msra.mxu0 0.0
    %73 = vmatprep.subr.mxu0 0.0
    %74 = vmatpush1.msra.mxu0 0.0
    %75 = vmatprep.subr.mxu0 0.0
    %76 = vmatpush1.msra.mxu0 0.0
    %77 = vmatprep.subr.mxu0 0.0
    %78 = vmatpush1.msra.mxu0 0.0
    %79 = vmatprep.subr.mxu0 0.0
    %80 = vmatpush1.msra.mxu0 0.0
    %81 = vmatprep.subr.mxu0 0.0
    %82 = vmatpush1.msra.mxu0 0.0
    %83 = vmatprep.subr.mxu0 0.0
    %84 = vmatpush1.msra.mxu0 0.0
    %85 = vmatprep.subr.mxu0 0.0
    %86 = vmatpush1.msra.mxu0 0.0
    %87 = vmatprep.subr.mxu0 0.0
    %88 = vmatpush1.msra.mxu0 0.0
    %89 = vmatprep.subr.mxu0 0.0
    %90 = vmatpush1.msra.mxu0 0.0
    %91 = vmatprep.subr.mxu0 0.0
    %92 = vmatpush1.msra.mxu0 0.0
    %93 = vmatprep.subr.mxu0 0.0
    %94 = vmatpush1.msra.mxu0 0.0
    %95 = vmatprep.subr.mxu0 0.0
    %96 = vmatpush1.msra.mxu0 0.0
    %97 = vmatprep.subr.mxu0 0.0
    %98 = vmatpush1.msra.mxu0 0.0
    %99 = vmatprep.subr.mxu0 0.0
    %100 = vmatpush1.msra.mxu0 0.0
    %101 = vmatprep.subr.mxu0 0.0
    %102 = vmatpush1.msra.mxu0 0.0
    %103 = vmatprep.subr.mxu0 0.0
    %104 = vmatpush1.msra.mxu0 0.0
    %105 = vmatprep.mubr.f32.mxu0 0.0
    %106 = vmatmul.mubr.f32.gmra.mrb[0].mxu0 %v36
    %v107 = vpop.f32.mrb[0].mxu0
    %v108 = vadd.f32 %v32, %v107
    %v109 = vpop.f32.mrb[0].mxu0
    %110 = vmatprep.mubr.f32.mxu0 0.0
    %111 = vmatmul.mubr.f32.gmra.mrb[0].mxu0 %v39
    %v112 = vpop.f32.mrb[0].mxu0
    %v113 = vadd.f32 %v32, %v112
    %v114 = vpop.f32.mrb[0].mxu0
    %115 = vdwg.mxu0
    %v116 = vmul.f32 %v108, 0.5
    %v117 = vmul.f32 %v113, 0.5
    %v118 = vmul.f32 %v108, 0.70710677
    %v119 = vmul.f32 %v113, 0.70710677
    %v120 = verf.f32.pop %v118
    %v121 = verf.f32.pop %v119
    %v122 = vadd.f32 %v120, 1.0
    %v123 = vadd.f32 %v121, 1.0
    %v124 = vmul.f32 %v116, %v122
    %v125 = vmul.f32 %v117, %v123
    %v126 = vld [vmem:[%s3] sm:$0xff]
    %v127 = vld [vmem:[%s3 + $0x8] sm:$0xff]
    %v128 = vld [vmem:[%s3 + $0x10] sm:$0xff]
    %v129 = vld [vmem:[%s3 + $0x18] sm:$0xff]
    %v130 = vld [vmem:[%s3 + $0x20] sm:$0xff]
    %v131 = vld [vmem:[%s3 + $0x28] sm:$0xff]
    %v132 = vld [vmem:[%s3 + $0x30] sm:$0xff]
    %v133 = vld [vmem:[%s3 + $0x38] sm:$0xff]
    %v134 = vld [vmem:[%s3 + $0x40] sm:$0xff]
    %v135 = vld [vmem:[%s3 + $0x48] sm:$0xff]
    %v136 = vld [vmem:[%s3 + $0x50] sm:$0xff]
    %v137 = vld [vmem:[%s3 + $0x58] sm:$0xff]
    %v138 = vld [vmem:[%s3 + $0x60] sm:$0xff]
    %v139 = vld [vmem:[%s3 + $0x68] sm:$0xff]
    %v140 = vld [vmem:[%s3 + $0x70] sm:$0xff]
    %v141 = vld [vmem:[%s3 + $0x78] sm:$0xff]
    %v142 = vld [vmem:[%s4] sm:$0x1]
    %v144 = vlaneseq
    %v145 = vshrl.u32 %v144, 7
    %v146 = vsub.s32 0, %v145
    %v147 = vrot.slane %v142, %v146
    %149 = vmatprep.subr.mxu0 0.0
    %150 = vmatpush1.msra.mxu0 %v126
    %151 = vmatprep.subr.mxu0 0.0
    %152 = vmatpush1.msra.mxu0 %v127
    %153 = vmatprep.subr.mxu0 0.0
    %154 = vmatpush1.msra.mxu0 %v128
    %155 = vmatprep.subr.mxu0 0.0
    %156 = vmatpush1.msra.mxu0 %v129
    %157 = vmatprep.subr.mxu0 0.0
    %158 = vmatpush1.msra.mxu0 %v130
    %159 = vmatprep.subr.mxu0 0.0
    %160 = vmatpush1.msra.mxu0 %v131
    %161 = vmatprep.subr.mxu0 0.0
    %162 = vmatpush1.msra.mxu0 %v132
    %163 = vmatprep.subr.mxu0 0.0
    %164 = vmatpush1.msra.mxu0 %v133
    %165 = vmatprep.subr.mxu0 0.0
    %166 = vmatpush1.msra.mxu0 %v134
    %167 = vmatprep.subr.mxu0 0.0
    %168 = vmatpush1.msra.mxu0 %v135
    %169 = vmatprep.subr.mxu0 0.0
    %170 = vmatpush1.msra.mxu0 %v136
    %171 = vmatprep.subr.mxu0 0.0
    %172 = vmatpush1.msra.mxu0 %v137
    %173 = vmatprep.subr.mxu0 0.0
    %174 = vmatpush1.msra.mxu0 %v138
    %175 = vmatprep.subr.mxu0 0.0
    %176 = vmatpush1.msra.mxu0 %v139
    %177 = vmatprep.subr.mxu0 0.0
    %178 = vmatpush1.msra.mxu0 %v140
    %179 = vmatprep.subr.mxu0 0.0
    %180 = vmatpush1.msra.mxu0 %v141
    %181 = vmatprep.subr.mxu0 0.0
    %182 = vmatpush1.msra.mxu0 0.0
    %183 = vmatprep.subr.mxu0 0.0
    %184 = vmatpush1.msra.mxu0 0.0
    %185 = vmatprep.subr.mxu0 0.0
    %186 = vmatpush1.msra.mxu0 0.0
    %187 = vmatprep.subr.mxu0 0.0
    %188 = vmatpush1.msra.mxu0 0.0
    %189 = vmatprep.subr.mxu0 0.0
    %190 = vmatpush1.msra.mxu0 0.0
    %191 = vmatprep.subr.mxu0 0.0
    %192 = vmatpush1.msra.mxu0 0.0
    %193 = vmatprep.subr.mxu0 0.0
    %194 = vmatpush1.msra.mxu0 0.0
    %195 = vmatprep.subr.mxu0 0.0
    %196 = vmatpush1.msra.mxu0 0.0
    %197 = vmatprep.subr.mxu0 0.0
    %198 = vmatpush1.msra.mxu0 0.0
    %199 = vmatprep.subr.mxu0 0.0
    %200 = vmatpush1.msra.mxu0 0.0
    %201 = vmatprep.subr.mxu0 0.0
    %202 = vmatpush1.msra.mxu0 0.0
    %203 = vmatprep.subr.mxu0 0.0
    %204 = vmatpush1.msra.mxu0 0.0
    %205 = vmatprep.subr.mxu0 0.0
    %206 = vmatpush1.msra.mxu0 0.0
    %207 = vmatprep.subr.mxu0 0.0
    %208 = vmatpush1.msra.mxu0 0.0
    %209 = vmatprep.subr.mxu0 0.0
    %210 = vmatpush1.msra.mxu0 0.0
    %211 = vmatprep.subr.mxu0 0.0
    %212 = vmatpush1.msra.mxu0 0.0
    %213 = vmatprep.mubr.f32.mxu0 0.0
    %214 = vmatmul.mubr.f32.gmra.mrb[0].mxu0 %v124
    %v215 = vpop.f32.mrb[0].mxu0
    %v216 = vadd.f32 %v147, %v215
    %v217 = vpop.f32.mrb[0].mxu0
    %218 = vmatprep.mubr.f32.mxu0 0.0
    %219 = vmatmul.mubr.f32.gmra.mrb[0].mxu0 %v125
    %v220 = vpop.f32.mrb[0].mxu0
    %v221 = vadd.f32 %v147, %v220
    %v222 = vpop.f32.mrb[0].mxu0
    %223 = vdwg.mxu0
    %224 = vst.msk [vmem:[#allocation2] sm:$0xff] %vm34, %v216
    %225 = vst.msk [vmem:[#allocation2 + $0x8] sm:$0xff] %vm34, %v221
    // Predicated region
    $region22: #{mlp_forward.1} parent=1 // pred_check
      _
    $region23: #{mlp_forward.1} parent=1 // pred_check_branch
      %227 = sbr.rel (0) target = $region25
    $region24: #{mlp_forward.1} parent=1 // pred_region
      %s229 = ssub.s32 256, 256
      %230 = vsyncadd [#allocation3], %s229
      %s231 = sshll.u32 [#allocation2], 4
      %s232 = int_to_ptr.vmem [resolvable:$true] %s231
      %237 = dma.vmem_to_hbm [thread:$0]  %s232, 256, %s5, [#allocation3], 128, 128, 8
    $region25: #{mlp_forward.1} parent=1 // pred_fallthru
      _
    // Predicated region
    $region26: #{mlp_forward.1} parent=1 // pred_check
      _
    $region27: #{mlp_forward.1} parent=1 // pred_check_branch
      %239 = sbr.rel (0) target = $region29
    $region28: #{mlp_forward.1} parent=1 // pred_region
      %240 = dma.done [#allocation3], 256
    $region29: #{mlp_forward.1} parent=1 // pred_fallthru
      _
    %241 = vsyncpa [#allocation3], 1

</llo_original>
